<compile_context>
chip_gen: v5e
topology: v5e:2x2
jax: 0.10.0
libtpu: 0.0.40
codegen_flags: <defaults>
</compile_context>

<pallas_src>
import math

import jax
import jax.numpy as jnp
from jax.experimental import pallas as pl
from jax.experimental.pallas import tpu as pltpu


def _linear_gauss_kernel(p_ref, x_ref, o_ref):
    # p_ref: (3, blk_f) f32 stacked params: row0=mean, row1=scale_lo, row2=scale_hi
    #        where scale = -0.5 * exp(-2 * std) (precomputed in the wrapper).
    # x_ref: (bn, blk_f) f32
    x = x_ref[...]
    mean = p_ref[0:1, :]

    # TODO(synk): torch.jit.script's `if x <= mean:` branches on a *scalar*
    # truth value; the elementwise `where` is the natural tensor semantics
    # and is kept intentionally.
    scale = jnp.where(x <= mean, p_ref[1:2, :], p_ref[2:3, :])

    # exp(-0.5*(x-mean)^2 / exp(std)^2) == exp((x-mean)^2 * (-0.5*exp(-2*std)))
    o_ref[...] = jnp.exp(jnp.square(x - mean) * scale)


def _round_up(x, m):
    return ((x + m - 1) // m) * m


def _round_down(x, m):
    return (x // m) * m


def _vmem_budget():
    """Returns (per-block byte budget, vmem_limit_bytes), generation-aware."""
    budget, limit = 4 << 20, 32 << 20          # safe on v5e / v6e / v7x
    try:
        info = pltpu.get_tpu_info()
        vmem_cap = getattr(info, "vmem_capacity_bytes", 0)
        if 0 < vmem_cap <= (64 << 20):
            # v7x-class core: only 64 MiB VMEM but ~3.2 TB/s HBM -> bigger
            # blocks to amortize the fixed ~0.35 us per-step overhead.
            budget, limit = 8 << 20, 48 << 20
    except Exception:
        pass
    return budget, limit


def _pick_blocks(n, f, budget_bytes):
    """Jointly pick (bn, blk_f): 8/128-aligned (or full-dim) blocks near budget."""
    budget_elems = budget_bytes // 4                       # f32 elements
    lane_cap = max(128, _round_down(budget_elems // 8, 128))
    blk_f = f if f <= lane_cap else lane_cap               # full dim or 128-multiple
    bn_target = max(8, budget_elems // blk_f)              # joint sizing: skinny F
    bn = n if n <= bn_target else max(8, _round_down(bn_target, 8))

    # Make sure the grid has >= 2 parallel steps so both TensorCores (v7x)
    # get work for small inputs.
    if pl.cdiv(n, bn) * pl.cdiv(f, blk_f) < 2:
        if f >= 256:
            blk_f = min(_round_up(pl.cdiv(f, 2), 128), blk_f)
        elif n >= 16:
            bn = min(_round_up(pl.cdiv(n, 2), 8), bn)
    return bn, blk_f


def linear_gauss(x, mean, low_std, high_std):
    """Pallas implementation of LinearGauss.forward.

    x:        (N, C, H, W) float32
    mean/low_std/high_std: (C, H, W) float16 parameters (broadcast over N)
    returns:  (N, C, H, W) float32 (torch type promotion of f32 x, f16 params)
    """
    n = x.shape[0]
    feat_shape = x.shape[1:]
    assert mean.shape == feat_shape
    f = math.prod(feat_shape)

    # Lane-dense 2D view of the data; params folded into one (3, f) slab.
    x2 = x.reshape(n, f)
    mean32 = mean.astype(jnp.float32).reshape(1, f)
    scale_lo = (-0.5 * jnp.exp(-2.0 * low_std.astype(jnp.float32))).reshape(1, f)
    scale_hi = (-0.5 * jnp.exp(-2.0 * high_std.astype(jnp.float32))).reshape(1, f)
    params = jnp.concatenate([mean32, scale_lo, scale_hi], axis=0)  # (3, f)

    budget_bytes, vmem_limit = _vmem_budget()
    bn, blk_f = _pick_blocks(n, f, budget_bytes)

    # Batch axis is the inner (fastest) grid axis -> the param slab keeps the
    # same block index across the inner loop and stays resident in VMEM.
    grid = (pl.cdiv(f, blk_f), pl.cdiv(n, bn))

    data_spec = pl.BlockSpec((bn, blk_f), lambda j, i: (i, j))
    param_spec = pl.BlockSpec((3, blk_f), lambda j, i: (0, j))

    out2 = pl.pallas_call(
        _linear_gauss_kernel,
        out_shape=jax.ShapeDtypeStruct((n, f), jnp.float32),
        grid_spec=pltpu.PrefetchScalarGridSpec(
            num_scalar_prefetch=0,
            grid=grid,
            in_specs=[param_spec, data_spec],
            out_specs=data_spec,
        ),
        compiler_params=pltpu.CompilerParams(
            dimension_semantics=("parallel", "parallel"),
            vmem_limit_bytes=vmem_limit,
        ),
        cost_estimate=pl.CostEstimate(
            flops=4 * n * f,
            transcendentals=n * f,
            bytes_accessed=8 * n * f + 12 * f,
        ),
    )(params, x2)

    return out2.reshape(x.shape)


def _reference(x, mean, low_std, high_std):
    # Pure-JAX reference in the original (exp/square/divide) formulation.
    m32, l32, h32 = (p.astype(jnp.float32) for p in (mean, low_std, high_std))
    std = jnp.exp(jnp.where(x <= m32, l32, h32))
    return jnp.exp(-0.5 * jnp.square(x - m32) / jnp.square(std))


if __name__ == "__main__":
    key = jax.random.PRNGKey(0)

    # Primary shape implied by the module spec.
    N, C, H, W = 2, 4, 16, 16
    kx, km, kl, kh = jax.random.split(key, 4)
    x = jax.random.normal(kx, (N, C, H, W), dtype=jnp.float32)
    # Parameters stored as float16 to match nn.Parameter(..., dtype=float16);
    # small random values so both branches of the piecewise std are exercised.
    mean = (0.1 * jax.random.normal(km, (C, H, W))).astype(jnp.float16)
    low_std = (0.1 * jax.random.normal(kl, (C, H, W))).astype(jnp.float16)
    high_std = (0.1 * jax.random.normal(kh, (C, H, W))).astype(jnp.float16)

    out = jax.block_until_ready(linear_gauss(x, mean, low_std, high_std))
    ref = _reference(x, mean, low_std, high_std)
    assert out.shape == x.shape and out.dtype == jnp.float32
    assert jnp.allclose(out, ref, atol=1e-5, rtol=1e-5)

    # Ragged shape (N not a multiple of 8, F not a multiple of 128) exercises
    # the cdiv / masked-edge tiling path.
    N2, C2, H2, W2 = 3, 5, 7, 9
    kx2, km2, kl2, kh2 = jax.random.split(jax.random.PRNGKey(1), 4)
    xr = jax.random.normal(kx2, (N2, C2, H2, W2), dtype=jnp.float32)
    mr = (0.1 * jax.random.normal(km2, (C2, H2, W2))).astype(jnp.float16)
    lr = (0.1 * jax.random.normal(kl2, (C2, H2, W2))).astype(jnp.float16)
    hr = (0.1 * jax.random.normal(kh2, (C2, H2, W2))).astype(jnp.float16)
    outr = jax.block_until_ready(linear_gauss(xr, mr, lr, hr))
    assert jnp.allclose(outr, _reference(xr, mr, lr, hr), atol=1e-5, rtol=1e-5)

    print("KERNEL_OK")
</pallas_src>

<mosaic_0001>
module attributes {stable_mosaic.version = 11 : i64} {
  func.func @_linear_gauss_kernel(%arg0: i32, %arg1: i32, %arg2: memref<3x512xf32, #tpu.memory_space<vmem>>, %arg3: memref<2x512xf32, #tpu.memory_space<vmem>>, %arg4: memref<2x512xf32, #tpu.memory_space<vmem>>) attributes {dimension_semantics = [#tpu.dimension_semantics<parallel>, #tpu.dimension_semantics<parallel>], iteration_bounds = array<i64: 2, 1>, scalar_prefetch = 0 : i64, scratch_operands = 0 : i64, tpu.core_type = #tpu.core_type<tc>, window_params = [{transform_indices = @transform_0, window_bounds = array<i64: 3, 512>}, {transform_indices = @transform_1, window_bounds = array<i64: 2, 512>}, {transform_indices = @transform_2, window_bounds = array<i64: 2, 512>}]} {
    %c0 = arith.constant 0 : index
    %c0_0 = arith.constant 0 : index
    %0 = vector.load %arg3[%c0, %c0_0] : memref<2x512xf32, #tpu.memory_space<vmem>>, vector<2x512xf32>
    %c0_1 = arith.constant 0 : index
    %c0_2 = arith.constant 0 : index
    %1 = vector.load %arg2[%c0_1, %c0_2] : memref<3x512xf32, #tpu.memory_space<vmem>>, vector<1x512xf32>
    %2 = vector.broadcast %1 : vector<1x512xf32> to vector<2x512xf32>
    %3 = arith.cmpf ole, %0, %2 : vector<2x512xf32>
    %c1 = arith.constant 1 : index
    %c0_3 = arith.constant 0 : index
    %4 = vector.load %arg2[%c1, %c0_3] : memref<3x512xf32, #tpu.memory_space<vmem>>, vector<1x512xf32>
    %c2 = arith.constant 2 : index
    %c0_4 = arith.constant 0 : index
    %5 = vector.load %arg2[%c2, %c0_4] : memref<3x512xf32, #tpu.memory_space<vmem>>, vector<1x512xf32>
    %6 = vector.shape_cast %4 : vector<1x512xf32> to vector<1x512xf32>
    %7 = vector.broadcast %6 : vector<1x512xf32> to vector<2x512xf32>
    %8 = vector.shape_cast %5 : vector<1x512xf32> to vector<1x512xf32>
    %9 = vector.broadcast %8 : vector<1x512xf32> to vector<2x512xf32>
    %10 = arith.select %3, %7, %9 : vector<2x512xi1>, vector<2x512xf32>
    %11 = vector.broadcast %1 : vector<1x512xf32> to vector<2x512xf32>
    %12 = arith.subf %0, %11 : vector<2x512xf32>
    %13 = arith.mulf %12, %12 : vector<2x512xf32>
    %14 = arith.mulf %13, %10 : vector<2x512xf32>
    %15 = math.exp %14 : vector<2x512xf32>
    %c0_5 = arith.constant 0 : index
    %c0_6 = arith.constant 0 : index
    %16 = vector.load %arg4[%c0_5, %c0_6] : memref<2x512xf32, #tpu.memory_space<vmem>>, vector<2x512xf32>
    tpu.vector_store %arg4[%c0_5, %c0_6], %15 {strides = array<i32>} : memref<2x512xf32, #tpu.memory_space<vmem>>, vector<2x512xf32>,
    return
  }
  func.func @transform_0(%arg0: i32, %arg1: i32) -> (i32, i32) {
    %c0_i32 = arith.constant 0 : i32
    %c0_i32_0 = arith.constant 0 : i32
    return %c0_i32, %arg0 : i32, i32
  }
  func.func @transform_1(%arg0: i32, %arg1: i32) -> (i32, i32) {
    %c0_i32 = arith.constant 0 : i32
    return %arg1, %arg0 : i32, i32
  }
  func.func @transform_2(%arg0: i32, %arg1: i32) -> (i32, i32) {
    %c0_i32 = arith.constant 0 : i32
    return %arg1, %arg0 : i32, i32
  }
}

</mosaic_0001>

<llo_original>
// kernel: tpu_custom_call.1
$region0: #{tpu_custom_call.1}
  #allocation0 [shape = 'u32[]', space=smem, size = 0x4, offset = 0x4, fixed_abs, tag = 'smem constant byte address 0x4 - core index']
  #allocation1 [shape = 'u32[72,128]{1,0:T(1,128)}', space=vmem, size = 0x9000, scoped, tag = 'internal scratch']
  %s0 = inlined_call_operand.hbm [shape: f32[3,1024], index: 0, kind: input, shape index: {}]
  %s1 = inlined_call_operand.hbm [shape: f32[2,1024], index: 1, kind: input, shape index: {}]
  %s2 = inlined_call_operand.hbm [shape: f32[2,1024], index: 2, kind: output, shape index: {}]
  %s3 = sld [smem:[#allocation0]]
  $region49: #{tpu_custom_call.1} parent=0
    _
  %s5 = ssub.s32 1, %s3
  %s6 = scalar_select 0, %s5, %s3
  $region1: #{tpu_custom_call.1} parent=0
    #allocation2 [shape = 'u8[16384]{0}', space=vmem, size = 0x4000, scoped, tag = 'input window, operand 0']
    #allocation3 [shape = 's32[2]{0}', space=sflag, size = 0x8, scoped, tag = 'scoped memory for tpu_custom_call.1']
    #allocation4 [shape = 's32[2]{0}', space=sflag, size = 0x8, scoped, tag = 'scoped memory for tpu_custom_call.1']
    #allocation5 [shape = 'u8[8192]{0}', space=vmem, size = 0x2000, scoped, tag = 'input window, operand 1']
    #allocation6 [shape = 's32[2]{0}', space=sflag, size = 0x8, scoped, tag = 'scoped memory for tpu_custom_call.1']
    #allocation7 [shape = 'u8[8192]{0}', space=vmem, size = 0x2000, scoped, tag = 'output window, operand 0']
    %7 = vsyncpa [#allocation3], 0
    %s8 = scalar_lea.sflag [#allocation3], 1
    %9 = vsyncpa %s8, 0
    %10 = vsyncpa [#allocation6], 0
    %s11 = scalar_lea.sflag [#allocation6], 1
    %12 = vsyncpa %s11, 0
    %13 = vsyncpa [#allocation4], 0
    %s14 = scalar_lea.sflag [#allocation4], 1
    %15 = vsyncpa %s14, 0
    loop: start=0, step=1, limit=4
    $region2: #{tpu_custom_call.1} parent=1 // loop_pre_header
      _
    $region3: #{tpu_custom_call.1} parent=1 // loop_header
      %s17 = sphi 0, %s21
      %p18 = scmp.ge.s32.totalorder %s17, 4
      %s24 = sphi 0, %s36
      %s25 = sphi 0, %s32
      %s26 = sphi 0, %s24
      %s27 = sphi 0, %s25
      %s28 = sphi 0, %s26
      %s29 = sphi 0, %s27
      %s39 = sphi 0, %s41
      %s42 = sphi 0, %s39
      %s43 = sphi 0, %s42
      %s59 = sphi 0, %s43
      %s67 = sphi 0, %s69
      %s70 = sphi 0, %s67
      %s71 = sphi 0, %s70
      %s87 = sphi 0, %s71
      %s95 = sphi 0, %s97
      %s98 = sphi 0, %s95
      %s99 = sphi 0, %s98
      %s115 = sphi 0, %s99
    $region4: #{tpu_custom_call.1} parent=1 // loop_header_branch
      %20 = sbr.rel (%p18) target = $region8
    $region5: #{tpu_custom_call.1} parent=1 // loop_body
      %s22 = ssub.s32 %s17, 1
      %s23 = ssub.s32 %s17, 2
      %s30 = sadd.s32 1, %s25
      %p31 = scmp.ge.s32.totalorder %s30, 1
      %s32 = scalar_select %p31, 0, %s30
      %s33 = sadd.s32 1, %s24
      %s34 = scalar_select %p31, %s33, %s24
      %p35 = scmp.ge.s32.totalorder %s34, 2
      %s36 = scalar_select %p35, 0, %s34
      %s37 = ssub.s32 %s24, %s36
      %p38 = scmp.eq.s32.totalorder %s37, 0
      %s40 = sadd.s32 %s39, 1
      %s41 = scalar_select %p38, %s39, %s40
      %p44 = pneg %p38
      %p45 = scmp.eq.s32.totalorder %s17, 1
      %p46 = por %p44, %p45
      %p47 = scmp.ne.s32.totalorder %s39, %s42
      %p48 = scmp.eq.s32.totalorder %s17, 0
      %p49 = por %p47, %p48
      %p50 = scmp.ne.s32.totalorder %s39, %s42
      %p51 = scmp.eq.s32.totalorder %s22, 1
      %p52 = por %p50, %p51
      %p53 = scmp.ne.s32.totalorder %s42, %s43
      %p54 = scmp.eq.s32.totalorder %s22, 0
      %p55 = por %p53, %p54
      %p56 = scmp.ne.s32.totalorder %s42, %s43
      %p57 = scmp.eq.s32.totalorder %s23, 1
      %p58 = por %p56, %p57
      %p60 = scmp.ne.s32.totalorder %s43, %s59
      %p61 = scmp.eq.s32.totalorder %s23, 0
      %p62 = por %p60, %p61
      %s63 = ssub.s32 %s25, %s32
      %s64 = ssub.s32 %s24, %s36
      %s65 = sor.u32 %s63, %s64
      %p66 = scmp.eq.s32.totalorder %s65, 0
      %s68 = sadd.s32 %s67, 1
      %s69 = scalar_select %p66, %s67, %s68
      %p72 = pneg %p66
      %p73 = scmp.eq.s32.totalorder %s17, 1
      %p74 = por %p72, %p73
      %p75 = scmp.ne.s32.totalorder %s67, %s70
      %p76 = scmp.eq.s32.totalorder %s17, 0
      %p77 = por %p75, %p76
      %p78 = scmp.ne.s32.totalorder %s67, %s70
      %p79 = scmp.eq.s32.totalorder %s22, 1
      %p80 = por %p78, %p79
      %p81 = scmp.ne.s32.totalorder %s70, %s71
      %p82 = scmp.eq.s32.totalorder %s22, 0
      %p83 = por %p81, %p82
      %p84 = scmp.ne.s32.totalorder %s70, %s71
      %p85 = scmp.eq.s32.totalorder %s23, 1
      %p86 = por %p84, %p85
      %p88 = scmp.ne.s32.totalorder %s71, %s87
      %p89 = scmp.eq.s32.totalorder %s23, 0
      %p90 = por %p88, %p89
      %s91 = ssub.s32 %s25, %s32
      %s92 = ssub.s32 %s24, %s36
      %s93 = sor.u32 %s91, %s92
      %p94 = scmp.eq.s32.totalorder %s93, 0
      %s96 = sadd.s32 %s95, 1
      %s97 = scalar_select %p94, %s95, %s96
      %p100 = pneg %p94
      %p101 = scmp.eq.s32.totalorder %s17, 1
      %p102 = por %p100, %p101
      %p103 = scmp.ne.s32.totalorder %s95, %s98
      %p104 = scmp.eq.s32.totalorder %s17, 0
      %p105 = por %p103, %p104
      %p106 = scmp.ne.s32.totalorder %s95, %s98
      %p107 = scmp.eq.s32.totalorder %s22, 1
      %p108 = por %p106, %p107
      %p109 = scmp.ne.s32.totalorder %s98, %s99
      %p110 = scmp.eq.s32.totalorder %s22, 0
      %p111 = por %p109, %p110
      %p112 = scmp.ne.s32.totalorder %s98, %s99
      %p113 = scmp.eq.s32.totalorder %s23, 1
      %p114 = por %p112, %p113
      %p116 = scmp.ne.s32.totalorder %s99, %s115
      %p117 = scmp.eq.s32.totalorder %s23, 0
      %p118 = por %p116, %p117
      %p119 = scmp.le.s32.totalorder 1, %s17
      %p120 = scmp.lt.s32.totalorder %s17, 3
      %p121 = pnand %p119, %p120
      %p122 = pneg %p121
      // Predicated region
      $region9: #{tpu_custom_call.1} parent=5 // pred_check
        _
      $region10: #{tpu_custom_call.1} parent=5 // pred_check_branch
        %124 = sbr.rel (%p121) target = $region12
      $region11: #{tpu_custom_call.1} parent=5 // pred_region
        %s125 = ssub.s32 %s17, 1
      $region12: #{tpu_custom_call.1} parent=5 // pred_fallthru
        _
      %p126 = scmp.lt.s32.totalorder %s17, 2
      // Predicated region
      $region13: #{tpu_custom_call.1} parent=5 // pred_check
        %p127 = pneg %p126
      $region14: #{tpu_custom_call.1} parent=5 // pred_check_branch
        %129 = sbr.rel (%p127) target = $region16
      $region15: #{tpu_custom_call.1} parent=5 // pred_region
        // Predicated region
        $region17: #{tpu_custom_call.1} parent=15 // pred_check
          %p130 = pneg %p49
        $region18: #{tpu_custom_call.1} parent=15 // pred_check_branch
          %132 = sbr.rel (%p130) target = $region20
        $region19: #{tpu_custom_call.1} parent=15 // pred_region
          %s133 = sand.u32 %s39, 1
          %s134 = scalar_lea.sflag [#allocation3], %s133
          %s135 = sand.u32 %s39, 1
          %s136 = smul.addr %s135, 16
          %s137 = scalar_lea.vmem [#allocation2], %s136
          %s138 = smul.u32 4, %s24
          %140 = vsyncadd %s134, 0
          %s141 = smul.addr %s138, 4
          %s142 = scalar_lea.hbm %s0, %s141
          %s144 = sshll.u32 %s142, 4
          %s145 = int_to_ptr.hbm [resolvable:$true] %s144
          %s146 = sshll.u32 %s137, 4
          %s147 = int_to_ptr.vmem [resolvable:$true] %s146
          %149 = dma.hbm_to_vmem [thread:$0]  %s145, 256, %s147, %s134
        $region20: #{tpu_custom_call.1} parent=15 // pred_fallthru
          _
        // Predicated region
        $region21: #{tpu_custom_call.1} parent=15 // pred_check
          %p150 = pneg %p77
        $region22: #{tpu_custom_call.1} parent=15 // pred_check_branch
          %152 = sbr.rel (%p150) target = $region24
        $region23: #{tpu_custom_call.1} parent=15 // pred_region
          %s153 = sand.u32 %s67, 1
          %s154 = scalar_lea.sflag [#allocation6], %s153
          %s155 = sand.u32 %s67, 1
          %s156 = smul.addr %s155, 8
          %s157 = scalar_lea.vmem [#allocation5], %s156
          %s158 = smul.u32 4, %s24
          %160 = vsyncadd %s154, 0
          %s161 = smul.addr %s25, 8
          %s162 = sadd.s32 %s158, %s161
          %s163 = smul.addr %s162, 2
          %s164 = scalar_lea.hbm %s1, %s163
          %s166 = sshll.u32 %s164, 4
          %s167 = int_to_ptr.hbm [resolvable:$true] %s166
          %s168 = sshll.u32 %s157, 4
          %s169 = int_to_ptr.vmem [resolvable:$true] %s168
          %171 = dma.hbm_to_vmem [thread:$0]  %s167, 128, %s169, %s154
        $region24: #{tpu_custom_call.1} parent=15 // pred_fallthru
          _
      $region16: #{tpu_custom_call.1} parent=5 // pred_fallthru
        _
      %p172 = scmp.le.s32.totalorder 1, %s17
      %p173 = scmp.lt.s32.totalorder %s17, 3
      %p174 = pnand %p172, %p173
      %p175 = pneg %p174
      // Predicated region
      $region25: #{tpu_custom_call.1} parent=5 // pred_check
        _
      $region26: #{tpu_custom_call.1} parent=5 // pred_check_branch
        %177 = sbr.rel (%p174) target = $region28
      $region27: #{tpu_custom_call.1} parent=5 // pred_region
        %s178 = ssub.s32 %s17, 1
        %s179 = sand.u32 %s42, 1
        %s180 = scalar_lea.sflag [#allocation3], %s179
        %s181 = sand.u32 %s42, 1
        %s182 = smul.addr %s181, 16
        %s183 = scalar_lea.vmem [#allocation2], %s182
        // Predicated region
        $region29: #{tpu_custom_call.1} parent=27 // pred_check
          %p184 = pneg %p55
        $region30: #{tpu_custom_call.1} parent=27 // pred_check_branch
          %186 = sbr.rel (%p184) target = $region32
        $region31: #{tpu_custom_call.1} parent=27 // pred_region
          %188 = dma.done %s180, 256
        $region32: #{tpu_custom_call.1} parent=27 // pred_fallthru
          _
        %s189 = sand.u32 %s70, 1
        %s190 = scalar_lea.sflag [#allocation6], %s189
        %s191 = sand.u32 %s70, 1
        %s192 = smul.addr %s191, 8
        %s193 = scalar_lea.vmem [#allocation5], %s192
        // Predicated region
        $region33: #{tpu_custom_call.1} parent=27 // pred_check
          %p194 = pneg %p83
        $region34: #{tpu_custom_call.1} parent=27 // pred_check_branch
          %196 = sbr.rel (%p194) target = $region36
        $region35: #{tpu_custom_call.1} parent=27 // pred_region
          %198 = dma.done %s190, 128
        $region36: #{tpu_custom_call.1} parent=27 // pred_fallthru
          _
        %s199 = sand.u32 %s42, 1
        %s200 = scalar_lea.sflag [#allocation3], %s199
        %s201 = sand.u32 %s42, 1
        %s202 = smul.addr %s201, 16
        %s203 = scalar_lea.vmem [#allocation2], %s202
        %p204 = pneg %p55
        %p205 = pneg %p52
        %s206 = sand.u32 %s70, 1
        %s207 = scalar_lea.sflag [#allocation6], %s206
        %s208 = sand.u32 %s70, 1
        %s209 = smul.addr %s208, 8
        %s210 = scalar_lea.vmem [#allocation5], %s209
        %p211 = pneg %p83
        %p212 = pneg %p80
        %p213 = pneg %p111
        %p214 = pneg %p108
        %s215 = sand.u32 %s98, 1
        %s216 = scalar_lea.sflag [#allocation4], %s215
        %s217 = sand.u32 %s98, 1
        %s218 = smul.addr %s217, 8
        %s219 = scalar_lea.vmem [#allocation7], %s218
        %s220 = smul.u32 4, %s26
        %s221 = smul.u32 4, %s26
        %s222 = smul.u32 4, %s26
        %v223 = vld [vmem:[%s193] sm:$0xff]
        %v224 = vld [vmem:[%s183] ss:$4 sm:$0xf]
        %v226 = vperm.slane %v224, 0
        %v227 = vperm.slane %v224, 1
        %v228 = vperm.slane %v224, 2
        %v229 = vperm.slane %v224, 3
        %v230 = vrot.slane %v227, 6
        %v231 = vrot.slane %v228, 4
        %v232 = vrot.slane %v229, 2
        %vm233 = vcmask 1041408
        %v234 = vsel %vm233, %v226, %v230
        %vm235 = vcmask 1045508
        %v236 = vsel %vm235, %v231, %v232
        %vm237 = vcmask 1043456
        %v238 = vsel %vm237, %v234, %v236
        %vm240 = vcmp.le.f32.partialorder %v223, %v238
        %s241 = scalar_lea.vmem %s183, 1 [#allocation2]
        %v242 = vld [vmem:[%s241] ss:$4 sm:$0xf]
        %s243 = scalar_lea.vmem %s183, 2 [#allocation2]
        %v244 = vld [vmem:[%s243] ss:$4 sm:$0xf]
        %v246 = vperm.slane %v242, 0
        %v247 = vperm.slane %v242, 1
        %v248 = vperm.slane %v242, 2
        %v249 = vperm.slane %v242, 3
        %v251 = vperm.slane %v244, 0
        %v252 = vperm.slane %v244, 1
        %v253 = vperm.slane %v244, 2
        %v254 = vperm.slane %v244, 3
        %v255 = vrot.slane %v247, 6
        %v256 = vrot.slane %v248, 4
        %v257 = vrot.slane %v249, 2
        %v258 = vsel %vm233, %v246, %v255
        %v259 = vsel %vm235, %v256, %v257
        %v260 = vsel %vm237, %v258, %v259
        %v262 = vrot.slane %v252, 6
        %v263 = vrot.slane %v253, 4
        %v264 = vrot.slane %v254, 2
        %v265 = vsel %vm233, %v251, %v262
        %v266 = vsel %vm235, %v263, %v264
        %v267 = vsel %vm237, %v265, %v266
        %v269 = vsel %vm240, %v260, %v267
        %v270 = vsub.f32 %v223, %v238
        %v271 = vmul.f32 %v270, %v270
        %v272 = vmul.f32 %v271, %v269
        %v273 = vmul.f32 %v272, 1.442695
        %v274 = vpow.pop %v273
        %275 = vst [vmem:[%s219] sm:$0xff] %v274
        %s276 = sand.u32 %s98, 1
        %s277 = scalar_lea.sflag [#allocation4], %s276
        %s278 = sand.u32 %s98, 1
        %s279 = smul.addr %s278, 8
        %s280 = scalar_lea.vmem [#allocation7], %s279
        // Predicated region
        $region37: #{tpu_custom_call.1} parent=27 // pred_check
          %p281 = pneg %p108
        $region38: #{tpu_custom_call.1} parent=27 // pred_check_branch
          %283 = sbr.rel (%p281) target = $region40
        $region39: #{tpu_custom_call.1} parent=27 // pred_region
          %s284 = smul.u32 4, %s26
          %286 = vsyncadd %s277, 0
          %s287 = smul.addr %s27, 8
          %s288 = sadd.s32 %s284, %s287
          %s289 = smul.addr %s288, 2
          %s290 = scalar_lea.hbm %s2, %s289
          %s292 = sshll.u32 %s280, 4
          %s293 = int_to_ptr.vmem [resolvable:$true] %s292
          %s294 = sshll.u32 %s290, 4
          %s295 = int_to_ptr.hbm [resolvable:$true] %s294
          %297 = dma.vmem_to_hbm [thread:$0]  %s293, 128, %s295, %s277
        $region40: #{tpu_custom_call.1} parent=27 // pred_fallthru
          _
      $region28: #{tpu_custom_call.1} parent=5 // pred_fallthru
        _
      %p298 = scmp.le.s32.totalorder 2, %s17
      // Predicated region
      $region41: #{tpu_custom_call.1} parent=5 // pred_check
        %p299 = pneg %p298
      $region42: #{tpu_custom_call.1} parent=5 // pred_check_branch
        %301 = sbr.rel (%p299) target = $region44
      $region43: #{tpu_custom_call.1} parent=5 // pred_region
        %s302 = ssub.s32 %s17, 2
        // Predicated region
        $region45: #{tpu_custom_call.1} parent=43 // pred_check
          %p303 = pneg %p114
        $region46: #{tpu_custom_call.1} parent=43 // pred_check_branch
          %305 = sbr.rel (%p303) target = $region48
        $region47: #{tpu_custom_call.1} parent=43 // pred_region
          %s306 = sand.u32 %s99, 1
          %s307 = scalar_lea.sflag [#allocation4], %s306
          %s308 = sand.u32 %s99, 1
          %s309 = smul.addr %s308, 8
          %s310 = scalar_lea.vmem [#allocation7], %s309
          %312 = dma.done %s307, 128
        $region48: #{tpu_custom_call.1} parent=43 // pred_fallthru
          _
      $region44: #{tpu_custom_call.1} parent=5 // pred_fallthru
        _
    $region6: #{tpu_custom_call.1} parent=1 // loop_footer
      %s21 = sadd.s32 1, %s17
    $region7: #{tpu_custom_call.1} parent=1 // loop_footer_branch
      %16 = sbr.rel target = $region3
    $region8: #{tpu_custom_call.1} parent=1 // loop_exit
      _
    %313 = vsyncpa [#allocation3], 1
    %s314 = scalar_lea.sflag [#allocation3], 1
    %315 = vsyncpa %s314, 1
    %316 = vsyncpa [#allocation6], 1
    %s317 = scalar_lea.sflag [#allocation6], 1
    %318 = vsyncpa %s317, 1
    %319 = vsyncpa [#allocation4], 1
    %s320 = scalar_lea.sflag [#allocation4], 1
    %321 = vsyncpa %s320, 1

</llo_original>
